<compile_context>
chip_gen: v6e
topology: v6e:2x2x1
jax: 0.10.0
libtpu: 0.0.40
codegen_flags: <defaults>
</compile_context>

<pallas_src>
import functools

import numpy as np
import jax
import jax.numpy as jnp
from jax.experimental import pallas as pl
from jax.experimental.pallas import tpu as pltpu


# --------------------------------------------------------------------------
# helpers
# --------------------------------------------------------------------------

def _round_up(x: int, m: int) -> int:
    return -(-x // m) * m


def _interp_matrix(in_size: int, out_size: int) -> np.ndarray:
    """Row-stochastic (out_size, in_size) linear-interp matrix (align_corners=False)."""
    if in_size == out_size:
        return np.eye(out_size, dtype=np.float32)
    scale = in_size / out_size
    dst = np.arange(out_size, dtype=np.float64)
    src = np.maximum((dst + 0.5) * scale - 0.5, 0.0)      # PyTorch clamps to >= 0
    i0 = np.minimum(np.floor(src).astype(np.int64), in_size - 1)
    i1 = np.minimum(i0 + 1, in_size - 1)
    w1 = src - i0
    r = np.zeros((out_size, in_size), dtype=np.float64)
    r[np.arange(out_size), i0] += 1.0 - w1
    r[np.arange(out_size), i1] += w1
    return r.astype(np.float32)


# --------------------------------------------------------------------------
# Pallas kernel: B volumes x one Kron-column tile per grid step
# --------------------------------------------------------------------------

def _trilinear_kernel(x_ref, rd_ref, khw_ref, o_ref, t_ref):
    """Fused separable trilinear resize for a batch of volumes.

    x_ref   : (B, D, H*W)      B input volumes (block index depends on i only)
    rd_ref  : (Do8, D)         depth interpolation matrix (grid-invariant)
    khw_ref : (H*W, TN)        column tile j of Kron(Rh, Rw)^T (zero padded)
    o_ref   : (B, Do8, TN)     lane-dense output tile
    t_ref   : (B*Do8, H*W) f32 scratch; persists across the column (j) axis
    """
    b_vols = x_ref.shape[0]
    do8 = rd_ref.shape[0]

    # Depth contraction once per batch of volumes (j == 0), cached in VMEM.
    @pl.when(pl.program_id(1) == 0)
    def _():
        rd = rd_ref[...]
        for b in range(b_vols):            # static unroll; b_vols is small
            t_ref[pl.ds(b * do8, do8), :] = jnp.dot(
                rd, x_ref[b], preferred_element_type=jnp.float32)

    # Fused H x W contraction against one column tile of Kron(Rh, Rw)^T.
    y = jnp.dot(t_ref[...], khw_ref[...], preferred_element_type=jnp.float32)
    o_ref[...] = y.reshape(b_vols, do8, -1).astype(o_ref.dtype)


def resize_trilinear(x, size, *, max_lane_tile=2048,
                     vmem_budget_bytes=16 << 20, max_batch=16):
    """x: (N, C, D, H, W) -> (N, C, *size). Trilinear, align_corners=False."""
    N, C, D, H, W = x.shape
    Do, Ho, Wo = size
    if (D, H, W) == (Do, Ho, Wo):
        return x

    dtype = x.dtype
    itemsize = jnp.dtype(dtype).itemsize
    HW = H * W
    lanes = Ho * Wo
    NC = N * C

    # ---- interpolation matrices (f32, PyTorch align_corners=False) ----------
    Do8 = _round_up(Do, 8)                     # sublane-aligned output rows
    rd_np = np.zeros((Do8, D), np.float32)
    rd_np[:Do] = _interp_matrix(D, Do)

    # Fused H/W factor: (H*W, Ho*Wo), columns zero-padded up to a multiple of
    # the lane tile so every output store is unmasked and lane-dense.
    # TODO(synk): for very large H*W the dense Kron GEMM does ~(H*Wo)/(H+Wo)x
    # more MXU FLOPs than a separable W-then-H contraction; switch to the
    # separable form past that crossover (it hits earliest on v5e).
    khw_cap = max(128, ((8 << 20) // max(HW * 4, 1)) // 128 * 128)  # <=~8MiB/tile
    TN = min(_round_up(lanes, 128), max_lane_tile, khw_cap)
    Lpad = _round_up(lanes, TN)
    n_col_tiles = Lpad // TN
    khw_np = np.zeros((HW, Lpad), np.float32)
    khw_np[:, :lanes] = np.kron(_interp_matrix(H, Ho), _interp_matrix(W, Wo)).T

    rd = jnp.asarray(rd_np)
    khw = jnp.asarray(khw_np)

    # ---- batch B (n, c) volumes per grid step under a VMEM budget -----------
    per_vol = (D * HW * itemsize * 2           # x block (double buffered)
               + Do8 * TN * itemsize * 2       # out block (double buffered)
               + Do8 * HW * 4)                 # f32 scratch
    fixed = Do8 * D * 4 + HW * TN * 4 * (1 if n_col_tiles == 1 else 2)
    max_b = max(1, min(max_batch, (vmem_budget_bytes - fixed) // per_vol))

    B = 1
    for b in range(1, NC + 1):
        if NC % b or b > max_b:
            continue
        if NC // b >= 2 or NC == 1:            # keep >=2 steps for v7x's 2 TCs
            B = b

    x3 = x.reshape(NC, D, HW)

    flops = int(2 * NC * (Do * D * HW + Do * HW * lanes))
    bytes_accessed = int(x.size * itemsize + NC * Do8 * Lpad * itemsize
                         + rd.size * 4 + khw.size * 4)
    vmem_limit = int(min(64 << 20, max(32 << 20, 2 * (fixed + B * per_vol))))

    if n_col_tiles == 1:
        khw_spec = pl.BlockSpec((HW, TN), lambda i, j: (0, j),
                                pipeline_mode=pl.Buffered(1))
    else:
        khw_spec = pl.BlockSpec((HW, TN), lambda i, j: (0, j))

    out = pl.pallas_call(
        _trilinear_kernel,
        out_shape=jax.ShapeDtypeStruct((NC, Do8, Lpad), dtype),
        grid=(NC // B, n_col_tiles),
        in_specs=[
            pl.BlockSpec((B, D, HW), lambda i, j: (i, 0, 0)),
            pl.BlockSpec((Do8, D), lambda i, j: (0, 0),
                         pipeline_mode=pl.Buffered(1)),
            khw_spec,
        ],
        out_specs=pl.BlockSpec((B, Do8, TN), lambda i, j: (i, 0, j)),
        scratch_shapes=[pltpu.VMEM((B * Do8, HW), jnp.float32)],
        compiler_params=pltpu.CompilerParams(
            dimension_semantics=("parallel", "arbitrary"),
            vmem_limit_bytes=vmem_limit),
        cost_estimate=pl.CostEstimate(flops=flops, transcendentals=0,
                                      bytes_accessed=bytes_accessed),
    )(x3, rd, khw)

    if Do8 != Do or Lpad != lanes:
        out = out[:, :Do, :lanes]
    return out.reshape(N, C, Do, Ho, Wo)


class ResizeLayer:
    """Pallas-TPU equivalent of the PyTorch ResizeLayer module."""

    def __init__(self, mode="trilinear", align_corners=False):
        if mode != "trilinear" or align_corners:
            # TODO(synk): only the module defaults (trilinear, align_corners=False)
            # are implemented.
            raise NotImplementedError("only trilinear / align_corners=False supported")
        self.mode = mode
        self.align_corners = align_corners

    def __call__(self, x, size):
        return resize_trilinear(x, tuple(size))


# --------------------------------------------------------------------------
# numpy float64 reference (exact same interpolation weights)
# --------------------------------------------------------------------------

def _reference(x_np, size):
    n, c, d, h, w = x_np.shape
    do, ho, wo = size
    rd = _interp_matrix(d, do).astype(np.float64)
    rh = _interp_matrix(h, ho).astype(np.float64)
    rw = _interp_matrix(w, wo).astype(np.float64)
    return np.einsum("ncdhw,qd,ph,ow->ncqpo", x_np.astype(np.float64),
                     rd, rh, rw, optimize=True)


# --------------------------------------------------------------------------
# main
# --------------------------------------------------------------------------

if __name__ == "__main__":
    key = jax.random.PRNGKey(0)
    N, C, D, H, W = 2, 4, 16, 16, 16
    x = jax.random.normal(key, (N, C, D, H, W), jnp.float32)
    x_np = np.asarray(x)

    layer = ResizeLayer()

    # upsample, downsample (lane padding 120->128), and odd sizes (Do/lane padding)
    for size in [(32, 24, 20), (8, 10, 12), (7, 9, 11)]:
        out = jax.jit(functools.partial(layer, size=size))(x)
        out = jax.block_until_ready(out)
        assert out.shape == (N, C) + tuple(size), out.shape
        out_np = np.asarray(out, dtype=np.float64)
        assert np.all(np.isfinite(out_np))
        err = float(np.max(np.abs(out_np - _reference(x_np, size))))
        # MXU f32 matmul passes are not bit-exact vs. float64 numpy; weights are
        # convex combinations, so structural bugs show up as O(1) errors.
        assert err < 5e-2, (size, err)

    print("KERNEL_OK")
</pallas_src>

<mosaic_0001>
module attributes {stable_mosaic.version = 11 : i64} {
  func.func @_trilinear_kernel(%arg0: i32, %arg1: i32, %arg2: memref<4x16x256xf32, #tpu.memory_space<vmem>>, %arg3: memref<32x16xf32, #tpu.memory_space<vmem>>, %arg4: memref<256x512xf32, #tpu.memory_space<vmem>>, %arg5: memref<4x32x512xf32, #tpu.memory_space<vmem>>, %arg6: memref<128x256xf32, #tpu.memory_space<vmem>>) attributes {dimension_semantics = [#tpu.dimension_semantics<parallel>, #tpu.dimension_semantics<arbitrary>], iteration_bounds = array<i64: 2, 1>, scalar_prefetch = 0 : i64, scratch_operands = 1 : i64, tpu.core_type = #tpu.core_type<tc>, window_params = [{transform_indices = @transform_0, window_bounds = array<i64: 4, 16, 256>}, {pipeline_mode = #tpu.pipeline_mode<synchronous>, transform_indices = @transform_1, window_bounds = array<i64: 32, 16>}, {pipeline_mode = #tpu.pipeline_mode<synchronous>, transform_indices = @transform_2, window_bounds = array<i64: 256, 512>}, {transform_indices = @transform_3, window_bounds = array<i64: 4, 32, 512>}]} {
    %c0_i32 = arith.constant 0 : i32
    %0 = arith.cmpi eq, %arg1, %c0_i32 : i32
    %1 = arith.extui %0 : i1 to i32
    %c0_i32_0 = arith.constant 0 : i32
    %2 = arith.cmpi ne, %1, %c0_i32_0 : i32
    scf.if %2 {
      %c0_7 = arith.constant 0 : index
      %c0_8 = arith.constant 0 : index
      %8 = vector.load %arg3[%c0_7, %c0_8] : memref<32x16xf32, #tpu.memory_space<vmem>>, vector<32x16xf32>
      %c0_9 = arith.constant 0 : index
      %c0_10 = arith.constant 0 : index
      %c0_11 = arith.constant 0 : index
      %9 = vector.load %arg2[%c0_9, %c0_10, %c0_11] : memref<4x16x256xf32, #tpu.memory_space<vmem>>, vector<1x16x256xf32>
      %10 = vector.shape_cast %9 : vector<1x16x256xf32> to vector<16x256xf32>
      %cst_12 = arith.constant dense<0.000000e+00> : vector<32x256xf32>
      %11 = tpu.matmul %8, %10, %cst_12 {dimension_numbers = #tpu.dot_dimension_numbers<[1], [0], [0], [1], [0, 0, 1, 1], [], []>} : vector<32x16xf32>, vector<16x256xf32>, vector<32x256xf32> -> vector<32x256xf32>
      %c0_13 = arith.constant 0 : index
      %c0_14 = arith.constant 0 : index
      %12 = vector.load %arg6[%c0_13, %c0_14] : memref<128x256xf32, #tpu.memory_space<vmem>>, vector<32x256xf32>
      tpu.vector_store %arg6[%c0_13, %c0_14], %11 {strides = array<i32>} : memref<128x256xf32, #tpu.memory_space<vmem>>, vector<32x256xf32>,
      %c1 = arith.constant 1 : index
      %c0_15 = arith.constant 0 : index
      %c0_16 = arith.constant 0 : index
      %13 = vector.load %arg2[%c1, %c0_15, %c0_16] : memref<4x16x256xf32, #tpu.memory_space<vmem>>, vector<1x16x256xf32>
      %14 = vector.shape_cast %13 : vector<1x16x256xf32> to vector<16x256xf32>
      %cst_17 = arith.constant dense<0.000000e+00> : vector<32x256xf32>
      %15 = tpu.matmul %8, %14, %cst_17 {dimension_numbers = #tpu.dot_dimension_numbers<[1], [0], [0], [1], [0, 0, 1, 1], [], []>} : vector<32x16xf32>, vector<16x256xf32>, vector<32x256xf32> -> vector<32x256xf32>
      %c32 = arith.constant 32 : index
      %c0_18 = arith.constant 0 : index
      %16 = vector.load %arg6[%c32, %c0_18] : memref<128x256xf32, #tpu.memory_space<vmem>>, vector<32x256xf32>
      tpu.vector_store %arg6[%c32, %c0_18], %15 {strides = array<i32>} : memref<128x256xf32, #tpu.memory_space<vmem>>, vector<32x256xf32>,
      %c2 = arith.constant 2 : index
      %c0_19 = arith.constant 0 : index
      %c0_20 = arith.constant 0 : index
      %17 = vector.load %arg2[%c2, %c0_19, %c0_20] : memref<4x16x256xf32, #tpu.memory_space<vmem>>, vector<1x16x256xf32>
      %18 = vector.shape_cast %17 : vector<1x16x256xf32> to vector<16x256xf32>
      %cst_21 = arith.constant dense<0.000000e+00> : vector<32x256xf32>
      %19 = tpu.matmul %8, %18, %cst_21 {dimension_numbers = #tpu.dot_dimension_numbers<[1], [0], [0], [1], [0, 0, 1, 1], [], []>} : vector<32x16xf32>, vector<16x256xf32>, vector<32x256xf32> -> vector<32x256xf32>
      %c64 = arith.constant 64 : index
      %c0_22 = arith.constant 0 : index
      %20 = vector.load %arg6[%c64, %c0_22] : memref<128x256xf32, #tpu.memory_space<vmem>>, vector<32x256xf32>
      tpu.vector_store %arg6[%c64, %c0_22], %19 {strides = array<i32>} : memref<128x256xf32, #tpu.memory_space<vmem>>, vector<32x256xf32>,
      %c3 = arith.constant 3 : index
      %c0_23 = arith.constant 0 : index
      %c0_24 = arith.constant 0 : index
      %21 = vector.load %arg2[%c3, %c0_23, %c0_24] : memref<4x16x256xf32, #tpu.memory_space<vmem>>, vector<1x16x256xf32>
      %22 = vector.shape_cast %21 : vector<1x16x256xf32> to vector<16x256xf32>
      %cst_25 = arith.constant dense<0.000000e+00> : vector<32x256xf32>
      %23 = tpu.matmul %8, %22, %cst_25 {dimension_numbers = #tpu.dot_dimension_numbers<[1], [0], [0], [1], [0, 0, 1, 1], [], []>} : vector<32x16xf32>, vector<16x256xf32>, vector<32x256xf32> -> vector<32x256xf32>
      %c96 = arith.constant 96 : index
      %c0_26 = arith.constant 0 : index
      %24 = vector.load %arg6[%c96, %c0_26] : memref<128x256xf32, #tpu.memory_space<vmem>>, vector<32x256xf32>
      tpu.vector_store %arg6[%c96, %c0_26], %23 {strides = array<i32>} : memref<128x256xf32, #tpu.memory_space<vmem>>, vector<32x256xf32>,
    } else {
    }
    %c0 = arith.constant 0 : index
    %c0_1 = arith.constant 0 : index
    %3 = vector.load %arg6[%c0, %c0_1] : memref<128x256xf32, #tpu.memory_space<vmem>>, vector<128x256xf32>
    %c0_2 = arith.constant 0 : index
    %c0_3 = arith.constant 0 : index
    %4 = vector.load %arg4[%c0_2, %c0_3] : memref<256x512xf32, #tpu.memory_space<vmem>>, vector<256x512xf32>
    %cst = arith.constant dense<0.000000e+00> : vector<128x512xf32>
    %5 = tpu.matmul %3, %4, %cst {dimension_numbers = #tpu.dot_dimension_numbers<[1], [0], [0], [1], [0, 0, 1, 1], [], []>} : vector<128x256xf32>, vector<256x512xf32>, vector<128x512xf32> -> vector<128x512xf32>
    %6 = vector.shape_cast %5 : vector<128x512xf32> to vector<4x32x512xf32>
    %c0_4 = arith.constant 0 : index
    %c0_5 = arith.constant 0 : index
    %c0_6 = arith.constant 0 : index
    %7 = vector.load %arg5[%c0_4, %c0_5, %c0_6] : memref<4x32x512xf32, #tpu.memory_space<vmem>>, vector<4x32x512xf32>
    tpu.vector_store %arg5[%c0_4, %c0_5, %c0_6], %6 {strides = array<i32>} : memref<4x32x512xf32, #tpu.memory_space<vmem>>, vector<4x32x512xf32>,
    return
  }
  func.func @transform_0(%arg0: i32, %arg1: i32) -> (i32, i32, i32) {
    %c0_i32 = arith.constant 0 : i32
    %c0_i32_0 = arith.constant 0 : i32
    %c0_i32_1 = arith.constant 0 : i32
    return %arg0, %c0_i32, %c0_i32_0 : i32, i32, i32
  }
  func.func @transform_1(%arg0: i32, %arg1: i32) -> (i32, i32) {
    %c0_i32 = arith.constant 0 : i32
    %c0_i32_0 = arith.constant 0 : i32
    %c0_i32_1 = arith.constant 0 : i32
    return %c0_i32, %c0_i32_0 : i32, i32
  }
  func.func @transform_2(%arg0: i32, %arg1: i32) -> (i32, i32) {
    %c0_i32 = arith.constant 0 : i32
    %c0_i32_0 = arith.constant 0 : i32
    return %c0_i32, %arg1 : i32, i32
  }
  func.func @transform_3(%arg0: i32, %arg1: i32) -> (i32, i32, i32) {
    %c0_i32 = arith.constant 0 : i32
    %c0_i32_0 = arith.constant 0 : i32
    return %arg0, %c0_i32, %arg1 : i32, i32, i32
  }
}

</mosaic_0001>

<llo_original>
// kernel: _unnamed_function_.1
$region0: #{_unnamed_function_.1}
  #allocation0 [shape = 'u32[]', space=smem, size = 0x4, offset = 0x4, fixed_abs, tag = 'smem constant byte address 0x4 - core index']
  #allocation1 [shape = 'u32[144,128]{1,0:T(1,128)}', space=vmem, size = 0x12000, scoped, tag = 'internal scratch']
  #allocation2 [shape = 'f32[128,256]{1,0:T(8,128)}', space=vmem, size = 0x20000, scoped, tag = 'scratch operand']
  %s0 = inlined_call_operand.vmem [shape: f32[8,16,256], index: 0, kind: input, shape index: {}]
  %s1 = inlined_call_operand.hbm [shape: f32[32,16], index: 1, kind: input, shape index: {}]
  %s2 = inlined_call_operand.hbm [shape: f32[256,512], index: 2, kind: input, shape index: {}]
  %s3 = inlined_call_operand.vmem [shape: f32[8,32,512], index: 3, kind: output, shape index: {}]
  %s4 = sld [smem:[#allocation0]]
  $region57: #{_unnamed_function_.1} parent=0
    _
  %s6 = ssub.s32 1, %s4
  %s7 = scalar_select 0, %s6, %s4
  $region1: #{_unnamed_function_.1} parent=0
    #allocation3 [shape = 'u8[16384]{0}', space=vmem, size = 0x4000, scoped, tag = 'input window, operand 1, single buffered']
    #allocation4 [shape = 's32[2]{0}', space=sflag, size = 0x8, scoped, tag = 'scoped memory for _unnamed_function_.1']
    #allocation5 [shape = 'u8[524288]{0}', space=vmem, size = 0x80000, scoped, tag = 'input window, operand 2, single buffered']
    #allocation6 [shape = 's32[1]{0}', space=sflag, size = 0x4, scoped, tag = 'scoped memory for _unnamed_function_.1']
    %8 = vsyncpa [#allocation4], 0
    %9 = vsyncpa [#allocation6], 0
    loop: start=0, step=1, limit=4
    $region2: #{_unnamed_function_.1} parent=1 // loop_pre_header
      _
    $region3: #{_unnamed_function_.1} parent=1 // loop_header
      %s11 = sphi 0, %s15
      %p12 = scmp.ge.s32.totalorder %s11, 4
      %s18 = sphi 0, %s30
      %s19 = sphi 0, %s26
      %s20 = sphi 0, %s18
      %s21 = sphi 0, %s19
      %s22 = sphi 0, %s20
      %s23 = sphi 0, %s21
      %s33 = sphi 0, %s35
      %s36 = sphi 0, %s33
      %s37 = sphi 0, %s36
      %s53 = sphi 0, %s37
      %s57 = sphi 0, %s57
      %s59 = sphi 0, %s57
      %s60 = sphi 0, %s59
      %s74 = sphi 0, %s60
      %s80 = sphi 0, %s82
      %s83 = sphi 0, %s80
      %s84 = sphi 0, %s83
      %s100 = sphi 0, %s84
      %s108 = sphi 0, %s110
      %s111 = sphi 0, %s108
      %s112 = sphi 0, %s111
      %s128 = sphi 0, %s112
    $region4: #{_unnamed_function_.1} parent=1 // loop_header_branch
      %14 = sbr.rel (%p12) target = $region8
    $region5: #{_unnamed_function_.1} parent=1 // loop_body
      %s16 = ssub.s32 %s11, 1
      %s17 = ssub.s32 %s11, 2
      %s24 = sadd.s32 1, %s19
      %p25 = scmp.ge.s32.totalorder %s24, 1
      %s26 = scalar_select %p25, 0, %s24
      %s27 = sadd.s32 1, %s18
      %s28 = scalar_select %p25, %s27, %s18
      %p29 = scmp.ge.s32.totalorder %s28, 2
      %s30 = scalar_select %p29, 0, %s28
      %s31 = ssub.s32 %s18, %s30
      %p32 = scmp.eq.s32.totalorder %s31, 0
      %s34 = sadd.s32 %s33, 1
      %s35 = scalar_select %p32, %s33, %s34
      %p38 = pneg %p32
      %p39 = scmp.eq.s32.totalorder %s11, 1
      %p40 = por %p38, %p39
      %p41 = scmp.ne.s32.totalorder %s33, %s36
      %p42 = scmp.eq.s32.totalorder %s11, 0
      %p43 = por %p41, %p42
      %p44 = scmp.ne.s32.totalorder %s33, %s36
      %p45 = scmp.eq.s32.totalorder %s16, 1
      %p46 = por %p44, %p45
      %p47 = scmp.ne.s32.totalorder %s36, %s37
      %p48 = scmp.eq.s32.totalorder %s16, 0
      %p49 = por %p47, %p48
      %p50 = scmp.ne.s32.totalorder %s36, %s37
      %p51 = scmp.eq.s32.totalorder %s17, 1
      %p52 = por %p50, %p51
      %p54 = scmp.ne.s32.totalorder %s37, %s53
      %p55 = scmp.eq.s32.totalorder %s17, 0
      %p56 = por %p54, %p55
      %s58 = sadd.s32 %s57, 1
      %p61 = scmp.eq.s32.totalorder %s11, 1
      %p62 = scmp.ne.s32.totalorder %s57, %s59
      %p63 = scmp.eq.s32.totalorder %s11, 0
      %p64 = por %p62, %p63
      %p65 = scmp.ne.s32.totalorder %s57, %s59
      %p66 = scmp.eq.s32.totalorder %s16, 1
      %p67 = por %p65, %p66
      %p68 = scmp.ne.s32.totalorder %s59, %s60
      %p69 = scmp.eq.s32.totalorder %s16, 0
      %p70 = por %p68, %p69
      %p71 = scmp.ne.s32.totalorder %s59, %s60
      %p72 = scmp.eq.s32.totalorder %s17, 1
      %p73 = por %p71, %p72
      %p75 = scmp.ne.s32.totalorder %s60, %s74
      %p76 = scmp.eq.s32.totalorder %s17, 0
      %p77 = por %p75, %p76
      %s78 = ssub.s32 %s19, %s26
      %p79 = scmp.eq.s32.totalorder %s78, 0
      %s81 = sadd.s32 %s80, 1
      %s82 = scalar_select %p79, %s80, %s81
      %p85 = pneg %p79
      %p86 = scmp.eq.s32.totalorder %s11, 1
      %p87 = por %p85, %p86
      %p88 = scmp.ne.s32.totalorder %s80, %s83
      %p89 = scmp.eq.s32.totalorder %s11, 0
      %p90 = por %p88, %p89
      %p91 = scmp.ne.s32.totalorder %s80, %s83
      %p92 = scmp.eq.s32.totalorder %s16, 1
      %p93 = por %p91, %p92
      %p94 = scmp.ne.s32.totalorder %s83, %s84
      %p95 = scmp.eq.s32.totalorder %s16, 0
      %p96 = por %p94, %p95
      %p97 = scmp.ne.s32.totalorder %s83, %s84
      %p98 = scmp.eq.s32.totalorder %s17, 1
      %p99 = por %p97, %p98
      %p101 = scmp.ne.s32.totalorder %s84, %s100
      %p102 = scmp.eq.s32.totalorder %s17, 0
      %p103 = por %p101, %p102
      %s104 = ssub.s32 %s18, %s30
      %s105 = ssub.s32 %s19, %s26
      %s106 = sor.u32 %s104, %s105
      %p107 = scmp.eq.s32.totalorder %s106, 0
      %s109 = sadd.s32 %s108, 1
      %s110 = scalar_select %p107, %s108, %s109
      %p113 = pneg %p107
      %p114 = scmp.eq.s32.totalorder %s11, 1
      %p115 = por %p113, %p114
      %p116 = scmp.ne.s32.totalorder %s108, %s111
      %p117 = scmp.eq.s32.totalorder %s11, 0
      %p118 = por %p116, %p117
      %p119 = scmp.ne.s32.totalorder %s108, %s111
      %p120 = scmp.eq.s32.totalorder %s16, 1
      %p121 = por %p119, %p120
      %p122 = scmp.ne.s32.totalorder %s111, %s112
      %p123 = scmp.eq.s32.totalorder %s16, 0
      %p124 = por %p122, %p123
      %p125 = scmp.ne.s32.totalorder %s111, %s112
      %p126 = scmp.eq.s32.totalorder %s17, 1
      %p127 = por %p125, %p126
      %p129 = scmp.ne.s32.totalorder %s112, %s128
      %p130 = scmp.eq.s32.totalorder %s17, 0
      %p131 = por %p129, %p130
      %p132 = scmp.le.s32.totalorder 1, %s11
      %p133 = scmp.lt.s32.totalorder %s11, 3
      %p134 = pnand %p132, %p133
      %p135 = pneg %p134
      // Predicated region
      $region9: #{_unnamed_function_.1} parent=5 // pred_check
        _
      $region10: #{_unnamed_function_.1} parent=5 // pred_check_branch
        %137 = sbr.rel (%p134) target = $region12
      $region11: #{_unnamed_function_.1} parent=5 // pred_region
        %s138 = ssub.s32 %s11, 1
        // Predicated region
        $region13: #{_unnamed_function_.1} parent=11 // pred_check
          %p139 = pneg %p70
        $region14: #{_unnamed_function_.1} parent=11 // pred_check_branch
          %141 = sbr.rel (%p139) target = $region16
        $region15: #{_unnamed_function_.1} parent=11 // pred_region
          %s143 = ssub.s32 512, 512
          %144 = vsyncadd [#allocation4], %s143
          %s145 = sshll.u32 [#allocation3], 4
          %s146 = int_to_ptr.vmem [resolvable:$true] %s145
          %151 = dma.hbm_to_vmem [thread:$0]  %s1, 512, %s146, [#allocation4], 128, 128, 8
        $region16: #{_unnamed_function_.1} parent=11 // pred_fallthru
          _
        // Predicated region
        $region17: #{_unnamed_function_.1} parent=11 // pred_check
          %p152 = pneg %p96
        $region18: #{_unnamed_function_.1} parent=11 // pred_check_branch
          %154 = sbr.rel (%p152) target = $region20
        $region19: #{_unnamed_function_.1} parent=11 // pred_region
          %s155 = smul.u32 4, %s21
          %s157 = ssub.s32 16384, 16384
          %158 = vsyncadd [#allocation6], %s157
          %s159 = smul.addr %s155, 128
          %s160 = scalar_lea.hbm %s2, %s159
          %s161 = sshll.u32 [#allocation5], 4
          %s162 = int_to_ptr.vmem [resolvable:$true] %s161
          %167 = dma.hbm_to_vmem [thread:$0]  %s160, 16384, %s162, [#allocation6], 512, 512, 32
        $region20: #{_unnamed_function_.1} parent=11 // pred_fallthru
          _
      $region12: #{_unnamed_function_.1} parent=5 // pred_fallthru
        _
      %p168 = scmp.lt.s32.totalorder %s11, 2
      // Predicated region
      $region21: #{_unnamed_function_.1} parent=5 // pred_check
        %p169 = pneg %p168
      $region22: #{_unnamed_function_.1} parent=5 // pred_check_branch
        %171 = sbr.rel (%p169) target = $region24
      $region23: #{_unnamed_function_.1} parent=5 // pred_region
        // Predicated region
        $region25: #{_unnamed_function_.1} parent=23 // pred_check
          %p172 = pneg %p43
        $region26: #{_unnamed_function_.1} parent=23 // pred_check_branch
          %174 = sbr.rel (%p172) target = $region28
        $region27: #{_unnamed_function_.1} parent=23 // pred_region
          %s175 = smul.u32 4, %s18
          %p176 = scmp.lt.s32.totalorder %s175, 7
          %s177 = scalar_select %p176, %s175, 7
          %s178 = smul.addr %s177, 4
          %s179 = smul.addr %s178, 8
          %s180 = scalar_lea.vmem %s0, %s179
          %s181 = smul.u32 4, %s18
        $region28: #{_unnamed_function_.1} parent=23 // pred_fallthru
          _
      $region24: #{_unnamed_function_.1} parent=5 // pred_fallthru
        _
      %p182 = scmp.le.s32.totalorder 1, %s11
      %p183 = scmp.lt.s32.totalorder %s11, 3
      %p184 = pnand %p182, %p183
      %p185 = pneg %p184
      // Predicated region
      $region29: #{_unnamed_function_.1} parent=5 // pred_check
        _
      $region30: #{_unnamed_function_.1} parent=5 // pred_check_branch
        %187 = sbr.rel (%p184) target = $region32
      $region31: #{_unnamed_function_.1} parent=5 // pred_region
        %s188 = ssub.s32 %s11, 1
        // Predicated region
        $region33: #{_unnamed_function_.1} parent=31 // pred_check
          %p189 = pneg %p70
        $region34: #{_unnamed_function_.1} parent=31 // pred_check_branch
          %191 = sbr.rel (%p189) target = $region36
        $region35: #{_unnamed_function_.1} parent=31 // pred_region
          %192 = dma.done [#allocation4], 512
        $region36: #{_unnamed_function_.1} parent=31 // pred_fallthru
          _
        // Predicated region
        $region37: #{_unnamed_function_.1} parent=31 // pred_check
          %p193 = pneg %p96
        $region38: #{_unnamed_function_.1} parent=31 // pred_check_branch
          %195 = sbr.rel (%p193) target = $region40
        $region39: #{_unnamed_function_.1} parent=31 // pred_region
          %196 = dma.done [#allocation6], 16384
        $region40: #{_unnamed_function_.1} parent=31 // pred_fallthru
          _
        %s197 = smul.u32 4, %s20
        %p198 = scmp.lt.s32.totalorder %s197, 7
        %s199 = scalar_select %p198, %s197, 7
        %s200 = smul.addr %s199, 4
        %s201 = smul.addr %s200, 8
        %s202 = scalar_lea.vmem %s0, %s201
        %p203 = pneg %p49
        %p204 = pneg %p46
        %p205 = pneg %p70
        %p206 = pneg %p67
        %p207 = pneg %p96
        %p208 = pneg %p93
        %p209 = pneg %p124
        %p210 = pneg %p121
        %s211 = smul.u32 4, %s20
        %s212 = smul.u32 4, %s21
        %p213 = scmp.lt.s32.totalorder %s211, 7
        %s214 = scalar_select %p213, %s211, 7
        %p215 = scmp.lt.s32.totalorder %s212, 3
        %s216 = scalar_select %p215, %s212, 3
        %s217 = smul.addr %s214, 16
        %s218 = sadd.s32 %s216, %s217
        %s219 = smul.addr %s218, 8
        %s220 = scalar_lea.vmem %s3, %s219
        %s221 = smul.u32 4, %s20
        %p222 = scmp.lt.s32.totalorder %s221, 7
        %s223 = scalar_select %p222, %s221, 7
        %s224 = smul.addr %s223, 4
        %s225 = smul.addr %s224, 8
        %s226 = scalar_lea.vmem %s0, %s225
        %s227 = smul.u32 4, %s20
        %s228 = smul.u32 4, %s21
        %s229 = smul.u32 4, %s20
        %s230 = smul.u32 4, %s21
        %p231 = scmp.lt.s32.totalorder %s229, 7
        %s232 = scalar_select %p231, %s229, 7
        %p233 = scmp.lt.s32.totalorder %s230, 3
        %s234 = scalar_select %p233, %s230, 3
        %s235 = smul.addr %s232, 16
        %s236 = sadd.s32 %s234, %s235
        %s237 = smul.addr %s236, 8
        %s238 = scalar_lea.vmem %s3, %s237
        %s239 = smul.u32 4, %s20
        %s240 = smul.u32 4, %s21
        %p241 = scmp.eq.s32.totalorder %s21, 0
        // Predicated region
        $region41: #{_unnamed_function_.1} parent=31 // pred_check
          %p242 = pneg %p241
        $region42: #{_unnamed_function_.1} parent=31 // pred_check_branch
          %244 = sbr.rel (%p242) target = $region44
        $region43: #{_unnamed_function_.1} parent=31 // pred_region
          %v245 = vld [vmem:[#allocation3] sm:$0xff]
          %v246 = vld [vmem:[#allocation3 + $0x8] sm:$0xff]
          %v247 = vld [vmem:[#allocation3 + $0x10] sm:$0xff]
          %v248 = vld [vmem:[#allocation3 + $0x18] sm:$0xff]
          %v249 = vld [vmem:[%s226] sm:$0xff]
          %v250 = vld [vmem:[%s226 + $0x8] sm:$0xff]
          %v251 = vld [vmem:[%s226 + $0x10] sm:$0xff]
          %v252 = vld [vmem:[%s226 + $0x18] sm:$0xff]
          %vm253 = vcmask 130048
          %v255 = vsel %vm253, %v245, 0
          %v258 = vsel %vm253, %v246, 0
          %v261 = vsel %vm253, %v247, 0
          %v264 = vsel %vm253, %v248, 0
          %266 = vmatprep.subr.mxu0 0.0
          %267 = vmatpush1.msra.mxu0 0.0
          %268 = vmatprep.subr.mxu0 0.0
          %269 = vmatpush1.msra.mxu0 0.0
          %270 = vmatprep.subr.mxu0 0.0
          %271 = vmatpush1.msra.mxu0 0.0
          %272 = vmatprep.subr.mxu0 0.0
          %273 = vmatpush1.msra.mxu0 0.0
          %274 = vmatprep.subr.mxu0 0.0
          %275 = vmatpush1.msra.mxu0 0.0
          %276 = vmatprep.subr.mxu0 0.0
          %277 = vmatpush1.msra.mxu0 0.0
          %278 = vmatprep.subr.mxu0 0.0
          %279 = vmatpush1.msra.mxu0 0.0
          %280 = vmatprep.subr.mxu0 0.0
          %281 = vmatpush1.msra.mxu0 0.0
          %282 = vmatprep.subr.mxu0 0.0
          %283 = vmatpush1.msra.mxu0 0.0
          %284 = vmatprep.subr.mxu0 0.0
          %285 = vmatpush1.msra.mxu0 0.0
          %286 = vmatprep.subr.mxu0 0.0
          %287 = vmatpush1.msra.mxu0 0.0
          %288 = vmatprep.subr.mxu0 0.0
          %289 = vmatpush1.msra.mxu0 0.0
          %290 = vmatprep.subr.mxu0 0.0
          %291 = vmatpush1.msra.mxu0 0.0
          %292 = vmatprep.subr.mxu0 0.0
          %293 = vmatpush1.msra.mxu0 0.0
          %294 = vmatprep.subr.mxu0 %v252
          %295 = vmatpush1.msra.mxu0 %v251
          %296 = vmatprep.subr.mxu0 %v250
          %297 = vmatpush1.msra.mxu0 %v249
          %298 = vmatprep.subr.mxu0 0.0
          %299 = vmatpush2.msra.mxu0 0.0
          %300 = vmatprep.subr.mxu0 0.0
          %301 = vmatpush2.msra.mxu0 0.0
          %302 = vmatprep.subr.mxu0 0.0
          %303 = vmatpush2.msra.mxu0 0.0
          %304 = vmatprep.subr.mxu0 0.0
          %305 = vmatpush2.msra.mxu0 0.0
          %306 = vmatprep.subr.mxu0 0.0
          %307 = vmatpush2.msra.mxu0 0.0
          %308 = vmatprep.subr.mxu0 0.0
          %309 = vmatpush2.msra.mxu0 0.0
          %310 = vmatprep.subr.mxu0 0.0
          %311 = vmatpush2.msra.mxu0 0.0
          %312 = vmatprep.subr.mxu0 0.0
          %313 = vmatpush2.msra.mxu0 0.0
          %314 = vmatprep.subr.mxu0 0.0
          %315 = vmatpush2.msra.mxu0 0.0
          %316 = vmatprep.subr.mxu0 0.0
          %317 = vmatpush2.msra.mxu0 0.0
          %318 = vmatprep.subr.mxu0 0.0
          %319 = vmatpush2.msra.mxu0 0.0
          %320 = vmatprep.subr.mxu0 0.0
          %321 = vmatpush2.msra.mxu0 0.0
          %322 = vmatprep.subr.mxu0 0.0
          %323 = vmatpush2.msra.mxu0 0.0
          %324 = vmatprep.subr.mxu0 0.0
          %325 = vmatpush2.msra.mxu0 0.0
          %326 = vmatprep.subr.mxu0 0.0
          %327 = vmatpush2.msra.mxu0 0.0
          %328 = vmatprep.subr.mxu0 0.0
          %329 = vmatpush2.msra.mxu0 0.0
          %330 = vmatprep.mubr.f32.mxu0 0.0
          %331 = vmatmul.mubr.f32.gmra.mxu0 %v255
          %v332 = vpop.f32.mrf.mxu0
          %v333 = vadd.f32 0.0, %v332
          %v334 = vpop.f32.mrf.mxu0
          %v335 = vadd.f32 0.0, %v334
          %336 = vmatprep.mubr.f32.mxu0 0.0
          %337 = vmatmul.mubr.f32.gmra.mxu0 %v258
          %v338 = vpop.f32.mrf.mxu0
          %v339 = vadd.f32 0.0, %v338
          %v340 = vpop.f32.mrf.mxu0
          %v341 = vadd.f32 0.0, %v340
          %342 = vmatprep.mubr.f32.mxu0 0.0
          %343 = vmatmul.mubr.f32.gmra.mxu0 %v261
          %v344 = vpop.f32.mrf.mxu0
          %v345 = vadd.f32 0.0, %v344
          %v346 = vpop.f32.mrf.mxu0
          %v347 = vadd.f32 0.0, %v346
          %348 = vmatprep.mubr.f32.mxu0 0.0
          %349 = vmatmul.mubr.f32.gmra.mxu0 %v264
          %v350 = vpop.f32.mrf.mxu0
          %v351 = vadd.f32 0.0, %v350
          %v352 = vpop.f32.mrf.mxu0
          %v353 = vadd.f32 0.0, %v352
          %354 = vdwg.mxu0
          %355 = vst [vmem:[#allocation2] sm:$0xff] %v333
          %356 = vst [vmem:[#allocation2 + $0x8] sm:$0xff] %v335
          %357 = vst [vmem:[#allocation2 + $0x10] sm:$0xff] %v339
          %358 = vst [vmem:[#allocation2 + $0x18] sm:$0xff] %v341
          %359 = vst [vmem:[#allocation2 + $0x20] sm:$0xff] %v345
          %360 = vst [vmem:[#allocation2 + $0x28] sm:$0xff] %v347
          %361 = vst [vmem:[#allocation2 + $0x30] sm:$0xff] %v351
          %362 = vst [vmem:[#allocation2 + $0x38] sm:$0xff] %v353
          %s363 = scalar_lea.vmem %s226, 32
          %v364 = vld [vmem:[%s363] sm:$0xff]
          %v365 = vld [vmem:[%s363 + $0x8] sm:$0xff]
          %v366 = vld [vmem:[%s363 + $0x10] sm:$0xff]
          %v367 = vld [vmem:[%s363 + $0x18] sm:$0xff]
          %368 = vmatprep.subr.mxu0 0.0
          %369 = vmatpush1.msra.mxu0 0.0
          %370 = vmatprep.subr.mxu0 0.0
          %371 = vmatpush1.msra.mxu0 0.0
          %372 = vmatprep.subr.mxu0 0.0
          %373 = vmatpush1.msra.mxu0 0.0
          %374 = vmatprep.subr.mxu0 0.0
          %375 = vmatpush1.msra.mxu0 0.0
          %376 = vmatprep.subr.mxu0 0.0
          %377 = vmatpush1.msra.mxu0 0.0
          %378 = vmatprep.subr.mxu0 0.0
          %379 = vmatpush1.msra.mxu0 0.0
          %380 = vmatprep.subr.mxu0 0.0
          %381 = vmatpush1.msra.mxu0 0.0
          %382 = vmatprep.subr.mxu0 0.0
          %383 = vmatpush1.msra.mxu0 0.0
          %384 = vmatprep.subr.mxu0 0.0
          %385 = vmatpush1.msra.mxu0 0.0
          %386 = vmatprep.subr.mxu0 0.0
          %387 = vmatpush1.msra.mxu0 0.0
          %388 = vmatprep.subr.mxu0 0.0
          %389 = vmatpush1.msra.mxu0 0.0
          %390 = vmatprep.subr.mxu0 0.0
          %391 = vmatpush1.msra.mxu0 0.0
          %392 = vmatprep.subr.mxu0 0.0
          %393 = vmatpush1.msra.mxu0 0.0
          %394 = vmatprep.subr.mxu0 0.0
          %395 = vmatpush1.msra.mxu0 0.0
          %396 = vmatprep.subr.mxu0 %v367
          %397 = vmatpush1.msra.mxu0 %v366
          %398 = vmatprep.subr.mxu0 %v365
          %399 = vmatpush1.msra.mxu0 %v364
          %400 = vmatprep.subr.mxu0 0.0
          %401 = vmatpush2.msra.mxu0 0.0
          %402 = vmatprep.subr.mxu0 0.0
          %403 = vmatpush2.msra.mxu0 0.0
          %404 = vmatprep.subr.mxu0 0.0
          %405 = vmatpush2.msra.mxu0 0.0
          %406 = vmatprep.subr.mxu0 0.0
          %407 = vmatpush2.msra.mxu0 0.0
          %408 = vmatprep.subr.mxu0 0.0
          %409 = vmatpush2.msra.mxu0 0.0
          %410 = vmatprep.subr.mxu0 0.0
          %411 = vmatpush2.msra.mxu0 0.0
          %412 = vmatprep.subr.mxu0 0.0
          %413 = vmatpush2.msra.mxu0 0.0
          %414 = vmatprep.subr.mxu0 0.0
          %415 = vmatpush2.msra.mxu0 0.0
          %416 = vmatprep.subr.mxu0 0.0
          %417 = vmatpush2.msra.mxu0 0.0
          %418 = vmatprep.subr.mxu0 0.0
          %419 = vmatpush2.msra.mxu0 0.0
          %420 = vmatprep.subr.mxu0 0.0
          %421 = vmatpush2.msra.mxu0 0.0
          %422 = vmatprep.subr.mxu0 0.0
          %423 = vmatpush2.msra.mxu0 0.0
          %424 = vmatprep.subr.mxu0 0.0
          %425 = vmatpush2.msra.mxu0 0.0
          %426 = vmatprep.subr.mxu0 0.0
          %427 = vmatpush2.msra.mxu0 0.0
          %428 = vmatprep.subr.mxu0 0.0
          %429 = vmatpush2.msra.mxu0 0.0
          %430 = vmatprep.subr.mxu0 0.0
          %431 = vmatpush2.msra.mxu0 0.0
          %432 = vmatprep.mubr.f32.mxu0 0.0
          %433 = vmatmul.mubr.f32.gmra.mxu0 %v255
          %v434 = vpop.f32.mrf.mxu0
          %v435 = vadd.f32 0.0, %v434
          %v436 = vpop.f32.mrf.mxu0
          %v437 = vadd.f32 0.0, %v436
          %438 = vmatprep.mubr.f32.mxu0 0.0
          %439 = vmatmul.mubr.f32.gmra.mxu0 %v258
          %v440 = vpop.f32.mrf.mxu0
          %v441 = vadd.f32 0.0, %v440
          %v442 = vpop.f32.mrf.mxu0
          %v443 = vadd.f32 0.0, %v442
          %444 = vmatprep.mubr.f32.mxu0 0.0
          %445 = vmatmul.mubr.f32.gmra.mxu0 %v261
          %v446 = vpop.f32.mrf.mxu0
          %v447 = vadd.f32 0.0, %v446
          %v448 = vpop.f32.mrf.mxu0
          %v449 = vadd.f32 0.0, %v448
          %450 = vmatprep.mubr.f32.mxu0 0.0
          %451 = vmatmul.mubr.f32.gmra.mxu0 %v264
          %v452 = vpop.f32.mrf.mxu0
          %v453 = vadd.f32 0.0, %v452
          %v454 = vpop.f32.mrf.mxu0
          %v455 = vadd.f32 0.0, %v454
          %456 = vdwg.mxu0
          %457 = vst [vmem:[#allocation2 + $0x40] sm:$0xff] %v435
          %458 = vst [vmem:[#allocation2 + $0x48] sm:$0xff] %v437
          %459 = vst [vmem:[#allocation2 + $0x50] sm:$0xff] %v441
          %460 = vst [vmem:[#allocation2 + $0x58] sm:$0xff] %v443
          %461 = vst [vmem:[#allocation2 + $0x60] sm:$0xff] %v447
          %462 = vst [vmem:[#allocation2 + $0x68] sm:$0xff] %v449
          %463 = vst [vmem:[#allocation2 + $0x70] sm:$0xff] %v453
          %464 = vst [vmem:[#allocation2 + $0x78] sm:$0xff] %v455
          %s465 = scalar_lea.vmem %s226, 64
          %v466 = vld [vmem:[%s465] sm:$0xff]
          %v467 = vld [vmem:[%s465 + $0x8] sm:$0xff]
          %v468 = vld [vmem:[%s465 + $0x10] sm:$0xff]
          %v469 = vld [vmem:[%s465 + $0x18] sm:$0xff]
          %470 = vmatprep.subr.mxu0 0.0
          %471 = vmatpush1.msra.mxu0 0.0
          %472 = vmatprep.subr.mxu0 0.0
          %473 = vmatpush1.msra.mxu0 0.0
          %474 = vmatprep.subr.mxu0 0.0
          %475 = vmatpush1.msra.mxu0 0.0
          %476 = vmatprep.subr.mxu0 0.0
          %477 = vmatpush1.msra.mxu0 0.0
          %478 = vmatprep.subr.mxu0 0.0
          %479 = vmatpush1.msra.mxu0 0.0
          %480 = vmatprep.subr.mxu0 0.0
          %481 = vmatpush1.msra.mxu0 0.0
          %482 = vmatprep.subr.mxu0 0.0
          %483 = vmatpush1.msra.mxu0 0.0
          %484 = vmatprep.subr.mxu0 0.0
          %485 = vmatpush1.msra.mxu0 0.0
          %486 = vmatprep.subr.mxu0 0.0
          %487 = vmatpush1.msra.mxu0 0.0
          %488 = vmatprep.subr.mxu0 0.0
          %489 = vmatpush1.msra.mxu0 0.0
          %490 = vmatprep.subr.mxu0 0.0
          %491 = vmatpush1.msra.mxu0 0.0
          %492 = vmatprep.subr.mxu0 0.0
          %493 = vmatpush1.msra.mxu0 0.0
          %494 = vmatprep.subr.mxu0 0.0
          %495 = vmatpush1.msra.mxu0 0.0
          %496 = vmatprep.subr.mxu0 0.0
          %497 = vmatpush1.msra.mxu0 0.0
          %498 = vmatprep.subr.mxu0 %v469
          %499 = vmatpush1.msra.mxu0 %v468
          %500 = vmatprep.subr.mxu0 %v467
          %501 = vmatpush1.msra.mxu0 %v466
          %502 = vmatprep.subr.mxu0 0.0
          %503 = vmatpush2.msra.mxu0 0.0
          %504 = vmatprep.subr.mxu0 0.0
          %505 = vmatpush2.msra.mxu0 0.0
          %506 = vmatprep.subr.mxu0 0.0
          %507 = vmatpush2.msra.mxu0 0.0
          %508 = vmatprep.subr.mxu0 0.0
          %509 = vmatpush2.msra.mxu0 0.0
          %510 = vmatprep.subr.mxu0 0.0
          %511 = vmatpush2.msra.mxu0 0.0
          %512 = vmatprep.subr.mxu0 0.0
          %513 = vmatpush2.msra.mxu0 0.0
          %514 = vmatprep.subr.mxu0 0.0
          %515 = vmatpush2.msra.mxu0 0.0
          %516 = vmatprep.subr.mxu0 0.0
          %517 = vmatpush2.msra.mxu0 0.0
          %518 = vmatprep.subr.mxu0 0.0
          %519 = vmatpush2.msra.mxu0 0.0
          %520 = vmatprep.subr.mxu0 0.0
          %521 = vmatpush2.msra.mxu0 0.0
          %522 = vmatprep.subr.mxu0 0.0
          %523 = vmatpush2.msra.mxu0 0.0
          %524 = vmatprep.subr.mxu0 0.0
          %525 = vmatpush2.msra.mxu0 0.0
          %526 = vmatprep.subr.mxu0 0.0
          %527 = vmatpush2.msra.mxu0 0.0
          %528 = vmatprep.subr.mxu0 0.0
          %529 = vmatpush2.msra.mxu0 0.0
          %530 = vmatprep.subr.mxu0 0.0
          %531 = vmatpush2.msra.mxu0 0.0
          %532 = vmatprep.subr.mxu0 0.0
          %533 = vmatpush2.msra.mxu0 0.0
          %534 = vmatprep.mubr.f32.mxu0 0.0
          %535 = vmatmul.mubr.f32.gmra.mxu0 %v255
          %v536 = vpop.f32.mrf.mxu0
          %v537 = vadd.f32 0.0, %v536
          %v538 = vpop.f32.mrf.mxu0
          %v539 = vadd.f32 0.0, %v538
          %540 = vmatprep.mubr.f32.mxu0 0.0
          %541 = vmatmul.mubr.f32.gmra.mxu0 %v258
          %v542 = vpop.f32.mrf.mxu0
          %v543 = vadd.f32 0.0, %v542
          %v544 = vpop.f32.mrf.mxu0
          %v545 = vadd.f32 0.0, %v544
          %546 = vmatprep.mubr.f32.mxu0 0.0
          %547 = vmatmul.mubr.f32.gmra.mxu0 %v261
          %v548 = vpop.f32.mrf.mxu0
          %v549 = vadd.f32 0.0, %v548
          %v550 = vpop.f32.mrf.mxu0
          %v551 = vadd.f32 0.0, %v550
          %552 = vmatprep.mubr.f32.mxu0 0.0
          %553 = vmatmul.mubr.f32.gmra.mxu0 %v264
          %v554 = vpop.f32.mrf.mxu0
          %v555 = vadd.f32 0.0, %v554
          %v556 = vpop.f32.mrf.mxu0
          %v557 = vadd.f32 0.0, %v556
          %558 = vdwg.mxu0
          %559 = vst [vmem:[#allocation2 + $0x80] sm:$0xff] %v537
          %560 = vst [vmem:[#allocation2 + $0x88] sm:$0xff] %v539
          %561 = vst [vmem:[#allocation2 + $0x90] sm:$0xff] %v543
          %562 = vst [vmem:[#allocation2 + $0x98] sm:$0xff] %v545
          %563 = vst [vmem:[#allocation2 + $0xa0] sm:$0xff] %v549
          %564 = vst [vmem:[#allocation2 + $0xa8] sm:$0xff] %v551
          %565 = vst [vmem:[#allocation2 + $0xb0] sm:$0xff] %v555
          %566 = vst [vmem:[#allocation2 + $0xb8] sm:$0xff] %v557
          %s567 = scalar_lea.vmem %s226, 96
          %v568 = vld [vmem:[%s567] sm:$0xff]
          %v569 = vld [vmem:[%s567 + $0x8] sm:$0xff]
          %v570 = vld [vmem:[%s567 + $0x10] sm:$0xff]
          %v571 = vld [vmem:[%s567 + $0x18] sm:$0xff]
          %572 = vmatprep.subr.mxu0 0.0
          %573 = vmatpush1.msra.mxu0 0.0
          %574 = vmatprep.subr.mxu0 0.0
          %575 = vmatpush1.msra.mxu0 0.0
          %576 = vmatprep.subr.mxu0 0.0
          %577 = vmatpush1.msra.mxu0 0.0
          %578 = vmatprep.subr.mxu0 0.0
          %579 = vmatpush1.msra.mxu0 0.0
          %580 = vmatprep.subr.mxu0 0.0
          %581 = vmatpush1.msra.mxu0 0.0
          %582 = vmatprep.subr.mxu0 0.0
          %583 = vmatpush1.msra.mxu0 0.0
          %584 = vmatprep.subr.mxu0 0.0
          %585 = vmatpush1.msra.mxu0 0.0
          %586 = vmatprep.subr.mxu0 0.0
          %587 = vmatpush1.msra.mxu0 0.0
          %588 = vmatprep.subr.mxu0 0.0
          %589 = vmatpush1.msra.mxu0 0.0
          %590 = vmatprep.subr.mxu0 0.0
          %591 = vmatpush1.msra.mxu0 0.0
          %592 = vmatprep.subr.mxu0 0.0
          %593 = vmatpush1.msra.mxu0 0.0
          %594 = vmatprep.subr.mxu0 0.0
          %595 = vmatpush1.msra.mxu0 0.0
          %596 = vmatprep.subr.mxu0 0.0
          %597 = vmatpush1.msra.mxu0 0.0
          %598 = vmatprep.subr.mxu0 0.0
          %599 = vmatpush1.msra.mxu0 0.0
          %600 = vmatprep.subr.mxu0 %v571
          %601 = vmatpush1.msra.mxu0 %v570
          %602 = vmatprep.subr.mxu0 %v569
          %603 = vmatpush1.msra.mxu0 %v568
          %604 = vmatprep.subr.mxu0 0.0
          %605 = vmatpush2.msra.mxu0 0.0
          %606 = vmatprep.subr.mxu0 0.0
          %607 = vmatpush2.msra.mxu0 0.0
          %608 = vmatprep.subr.mxu0 0.0
          %609 = vmatpush2.msra.mxu0 0.0
          %610 = vmatprep.subr.mxu0 0.0
          %611 = vmatpush2.msra.mxu0 0.0
          %612 = vmatprep.subr.mxu0 0.0
          %613 = vmatpush2.msra.mxu0 0.0
          %614 = vmatprep.subr.mxu0 0.0
          %615 = vmatpush2.msra.mxu0 0.0
          %616 = vmatprep.subr.mxu0 0.0
          %617 = vmatpush2.msra.mxu0 0.0
          %618 = vmatprep.subr.mxu0 0.0
          %619 = vmatpush2.msra.mxu0 0.0
          %620 = vmatprep.subr.mxu0 0.0
          %621 = vmatpush2.msra.mxu0 0.0
          %622 = vmatprep.subr.mxu0 0.0
          %623 = vmatpush2.msra.mxu0 0.0
          %624 = vmatprep.subr.mxu0 0.0
          %625 = vmatpush2.msra.mxu0 0.0
          %626 = vmatprep.subr.mxu0 0.0
          %627 = vmatpush2.msra.mxu0 0.0
          %628 = vmatprep.subr.mxu0 0.0
          %629 = vmatpush2.msra.mxu0 0.0
          %630 = vmatprep.subr.mxu0 0.0
          %631 = vmatpush2.msra.mxu0 0.0
          %632 = vmatprep.subr.mxu0 0.0
          %633 = vmatpush2.msra.mxu0 0.0
          %634 = vmatprep.subr.mxu0 0.0
          %635 = vmatpush2.msra.mxu0 0.0
          %636 = vmatprep.mubr.f32.mxu0 0.0
          %637 = vmatmul.mubr.f32.gmra.mxu0 %v255
          %v638 = vpop.f32.mrf.mxu0
          %v639 = vadd.f32 0.0, %v638
          %v640 = vpop.f32.mrf.mxu0
          %v641 = vadd.f32 0.0, %v640
          %642 = vmatprep.mubr.f32.mxu0 0.0
          %643 = vmatmul.mubr.f32.gmra.mxu0 %v258
          %v644 = vpop.f32.mrf.mxu0
          %v645 = vadd.f32 0.0, %v644
          %v646 = vpop.f32.mrf.mxu0
          %v647 = vadd.f32 0.0, %v646
          %648 = vmatprep.mubr.f32.mxu0 0.0
          %649 = vmatmul.mubr.f32.gmra.mxu0 %v261
          %v650 = vpop.f32.mrf.mxu0
          %v651 = vadd.f32 0.0, %v650
          %v652 = vpop.f32.mrf.mxu0
          %v653 = vadd.f32 0.0, %v652
          %654 = vmatprep.mubr.f32.mxu0 0.0
          %655 = vmatmul.mubr.f32.gmra.mxu0 %v264
          %v656 = vpop.f32.mrf.mxu0
          %v657 = vadd.f32 0.0, %v656
          %v658 = vpop.f32.mrf.mxu0
          %v659 = vadd.f32 0.0, %v658
          %660 = vdwg.mxu0
          %661 = vst [vmem:[#allocation2 + $0xc0] sm:$0xff] %v639
          %662 = vst [vmem:[#allocation2 + $0xc8] sm:$0xff] %v641
          %663 = vst [vmem:[#allocation2 + $0xd0] sm:$0xff] %v645
          %664 = vst [vmem:[#allocation2 + $0xd8] sm:$0xff] %v647
          %665 = vst [vmem:[#allocation2 + $0xe0] sm:$0xff] %v651
          %666 = vst [vmem:[#allocation2 + $0xe8] sm:$0xff] %v653
          %667 = vst [vmem:[#allocation2 + $0xf0] sm:$0xff] %v657
          %668 = vst [vmem:[#allocation2 + $0xf8] sm:$0xff] %v659
        $region44: #{_unnamed_function_.1} parent=31 // pred_fallthru
          _
        %v669 = vld [vmem:[#allocation2] sm:$0xff]
        %v670 = vld [vmem:[#allocation2 + $0x8] sm:$0xff]
        %v671 = vld [vmem:[#allocation2 + $0x10] sm:$0xff]
        %v672 = vld [vmem:[#allocation2 + $0x18] sm:$0xff]
        %v673 = vld [vmem:[#allocation2 + $0x20] sm:$0xff]
        %v674 = vld [vmem:[#allocation2 + $0x28] sm:$0xff]
        %v675 = vld [vmem:[#allocation2 + $0x30] sm:$0xff]
        %v676 = vld [vmem:[#allocation2 + $0x38] sm:$0xff]
        %v677 = vld [vmem:[#allocation2 + $0x40] sm:$0xff]
        %v678 = vld [vmem:[#allocation2 + $0x48] sm:$0xff]
        %v679 = vld [vmem:[#allocation2 + $0x50] sm:$0xff]
        %v680 = vld [vmem:[#allocation2 + $0x58] sm:$0xff]
        %v681 = vld [vmem:[#allocation2 + $0x60] sm:$0xff]
        %v682 = vld [vmem:[#allocation2 + $0x68] sm:$0xff]
        %v683 = vld [vmem:[#allocation2 + $0x70] sm:$0xff]
        %v684 = vld [vmem:[#allocation2 + $0x78] sm:$0xff]
        %v685 = vld [vmem:[#allocation2 + $0x80] sm:$0xff]
        %v686 = vld [vmem:[#allocation2 + $0x88] sm:$0xff]
        %v687 = vld [vmem:[#allocation2 + $0x90] sm:$0xff]
        %v688 = vld [vmem:[#allocation2 + $0x98] sm:$0xff]
        %v689 = vld [vmem:[#allocation2 + $0xa0] sm:$0xff]
        %v690 = vld [vmem:[#allocation2 + $0xa8] sm:$0xff]
        %v691 = vld [vmem:[#allocation2 + $0xb0] sm:$0xff]
        %v692 = vld [vmem:[#allocation2 + $0xb8] sm:$0xff]
        %v693 = vld [vmem:[#allocation2 + $0xc0] sm:$0xff]
        %v694 = vld [vmem:[#allocation2 + $0xc8] sm:$0xff]
        %v695 = vld [vmem:[#allocation2 + $0xd0] sm:$0xff]
        %v696 = vld [vmem:[#allocation2 + $0xd8] sm:$0xff]
        %v697 = vld [vmem:[#allocation2 + $0xe0] sm:$0xff]
        %v698 = vld [vmem:[#allocation2 + $0xe8] sm:$0xff]
        %v699 = vld [vmem:[#allocation2 + $0xf0] sm:$0xff]
        %v700 = vld [vmem:[#allocation2 + $0xf8] sm:$0xff]
        %v701 = vld [vmem:[#allocation5] sm:$0xff]
        %v702 = vld [vmem:[#allocation5 + $0x8] sm:$0xff]
        %v703 = vld [vmem:[#allocation5 + $0x10] sm:$0xff]
        %v704 = vld [vmem:[#allocation5 + $0x18] sm:$0xff]
        %v705 = vld [vmem:[#allocation5 + $0x20] sm:$0xff]
        %v706 = vld [vmem:[#allocation5 + $0x28] sm:$0xff]
        %v707 = vld [vmem:[#allocation5 + $0x30] sm:$0xff]
        %v708 = vld [vmem:[#allocation5 + $0x38] sm:$0xff]
        %v709 = vld [vmem:[#allocation5 + $0x40] sm:$0xff]
        %v710 = vld [vmem:[#allocation5 + $0x48] sm:$0xff]
        %v711 = vld [vmem:[#allocation5 + $0x50] sm:$0xff]
        %v712 = vld [vmem:[#allocation5 + $0x58] sm:$0xff]
        %v713 = vld [vmem:[#allocation5 + $0x60] sm:$0xff]
        %v714 = vld [vmem:[#allocation5 + $0x68] sm:$0xff]
        %v715 = vld [vmem:[#allocation5 + $0x70] sm:$0xff]
        %v716 = vld [vmem:[#allocation5 + $0x78] sm:$0xff]
        %v717 = vld [vmem:[#allocation5 + $0x80] sm:$0xff]
        %v718 = vld [vmem:[#allocation5 + $0x88] sm:$0xff]
        %v719 = vld [vmem:[#allocation5 + $0x90] sm:$0xff]
        %v720 = vld [vmem:[#allocation5 + $0x98] sm:$0xff]
        %v721 = vld [vmem:[#allocation5 + $0xa0] sm:$0xff]
        %v722 = vld [vmem:[#allocation5 + $0xa8] sm:$0xff]
        %v723 = vld [vmem:[#allocation5 + $0xb0] sm:$0xff]
        %v724 = vld [vmem:[#allocation5 + $0xb8] sm:$0xff]
        %v725 = vld [vmem:[#allocation5 + $0xc0] sm:$0xff]
        %v726 = vld [vmem:[#allocation5 + $0xc8] sm:$0xff]
        %v727 = vld [vmem:[#allocation5 + $0xd0] sm:$0xff]
        %v728 = vld [vmem:[#allocation5 + $0xd8] sm:$0xff]
        %v729 = vld [vmem:[#allocation5 + $0xe0] sm:$0xff]
        %v730 = vld [vmem:[#allocation5 + $0xe8] sm:$0xff]
        %v731 = vld [vmem:[#allocation5 + $0xf0] sm:$0xff]
        %v732 = vld [vmem:[#allocation5 + $0xf8] sm:$0xff]
        %v733 = vld [vmem:[#allocation5 + $0x100] sm:$0xff]
        %v734 = vld [vmem:[#allocation5 + $0x108] sm:$0xff]
        %v735 = vld [vmem:[#allocation5 + $0x110] sm:$0xff]
        %v736 = vld [vmem:[#allocation5 + $0x118] sm:$0xff]
        %v737 = vld [vmem:[#allocation5 + $0x120] sm:$0xff]
        %v738 = vld [vmem:[#allocation5 + $0x128] sm:$0xff]
        %v739 = vld [vmem:[#allocation5 + $0x130] sm:$0xff]
        %v740 = vld [vmem:[#allocation5 + $0x138] sm:$0xff]
        %v741 = vld [vmem:[#allocation5 + $0x140] sm:$0xff]
        %v742 = vld [vmem:[#allocation5 + $0x148] sm:$0xff]
        %v743 = vld [vmem:[#allocation5 + $0x150] sm:$0xff]
        %v744 = vld [vmem:[#allocation5 + $0x158] sm:$0xff]
        %v745 = vld [vmem:[#allocation5 + $0x160] sm:$0xff]
        %v746 = vld [vmem:[#allocation5 + $0x168] sm:$0xff]
        %v747 = vld [vmem:[#allocation5 + $0x170] sm:$0xff]
        %v748 = vld [vmem:[#allocation5 + $0x178] sm:$0xff]
        %v749 = vld [vmem:[#allocation5 + $0x180] sm:$0xff]
        %v750 = vld [vmem:[#allocation5 + $0x188] sm:$0xff]
        %v751 = vld [vmem:[#allocation5 + $0x190] sm:$0xff]
        %v752 = vld [vmem:[#allocation5 + $0x198] sm:$0xff]
        %v753 = vld [vmem:[#allocation5 + $0x1a0] sm:$0xff]
        %v754 = vld [vmem:[#allocation5 + $0x1a8] sm:$0xff]
        %v755 = vld [vmem:[#allocation5 + $0x1b0] sm:$0xff]
        %v756 = vld [vmem:[#allocation5 + $0x1b8] sm:$0xff]
        %v757 = vld [vmem:[#allocation5 + $0x1c0] sm:$0xff]
        %v758 = vld [vmem:[#allocation5 + $0x1c8] sm:$0xff]
        %v759 = vld [vmem:[#allocation5 + $0x1d0] sm:$0xff]
        %v760 = vld [vmem:[#allocation5 + $0x1d8] sm:$0xff]
        %v761 = vld [vmem:[#allocation5 + $0x1e0] sm:$0xff]
        %v762 = vld [vmem:[#allocation5 + $0x1e8] sm:$0xff]
        %v763 = vld [vmem:[#allocation5 + $0x1f0] sm:$0xff]
        %v764 = vld [vmem:[#allocation5 + $0x1f8] sm:$0xff]
        %v765 = vld [vmem:[#allocation5 + $0x200] sm:$0xff]
        %v766 = vld [vmem:[#allocation5 + $0x208] sm:$0xff]
        %v767 = vld [vmem:[#allocation5 + $0x210] sm:$0xff]
        %v768 = vld [vmem:[#allocation5 + $0x218] sm:$0xff]
        %v769 = vld [vmem:[#allocation5 + $0x220] sm:$0xff]
        %v770 = vld [vmem:[#allocation5 + $0x228] sm:$0xff]
        %v771 = vld [vmem:[#allocation5 + $0x230] sm:$0xff]
        %v772 = vld [vmem:[#allocation5 + $0x238] sm:$0xff]
        %v773 = vld [vmem:[#allocation5 + $0x240] sm:$0xff]
        %v774 = vld [vmem:[#allocation5 + $0x248] sm:$0xff]
        %v775 = vld [vmem:[#allocation5 + $0x250] sm:$0xff]
        %v776 = vld [vmem:[#allocation5 + $0x258] sm:$0xff]
        %v777 = vld [vmem:[#allocation5 + $0x260] sm:$0xff]
        %v778 = vld [vmem:[#allocation5 + $0x268] sm:$0xff]
        %v779 = vld [vmem:[#allocation5 + $0x270] sm:$0xff]
        %v780 = vld [vmem:[#allocation5 + $0x278] sm:$0xff]
        %v781 = vld [vmem:[#allocation5 + $0x280] sm:$0xff]
        %v782 = vld [vmem:[#allocation5 + $0x288] sm:$0xff]
        %v783 = vld [vmem:[#allocation5 + $0x290] sm:$0xff]
        %v784 = vld [vmem:[#allocation5 + $0x298] sm:$0xff]
        %v785 = vld [vmem:[#allocation5 + $0x2a0] sm:$0xff]
        %v786 = vld [vmem:[#allocation5 + $0x2a8] sm:$0xff]
        %v787 = vld [vmem:[#allocation5 + $0x2b0] sm:$0xff]
        %v788 = vld [vmem:[#allocation5 + $0x2b8] sm:$0xff]
        %v789 = vld [vmem:[#allocation5 + $0x2c0] sm:$0xff]
        %v790 = vld [vmem:[#allocation5 + $0x2c8] sm:$0xff]
        %v791 = vld [vmem:[#allocation5 + $0x2d0] sm:$0xff]
        %v792 = vld [vmem:[#allocation5 + $0x2d8] sm:$0xff]
        %v793 = vld [vmem:[#allocation5 + $0x2e0] sm:$0xff]
        %v794 = vld [vmem:[#allocation5 + $0x2e8] sm:$0xff]
        %v795 = vld [vmem:[#allocation5 + $0x2f0] sm:$0xff]
        %v796 = vld [vmem:[#allocation5 + $0x2f8] sm:$0xff]
        %v797 = vld [vmem:[#allocation5 + $0x300] sm:$0xff]
        %v798 = vld [vmem:[#allocation5 + $0x308] sm:$0xff]
        %v799 = vld [vmem:[#allocation5 + $0x310] sm:$0xff]
        %v800 = vld [vmem:[#allocation5 + $0x318] sm:$0xff]
        %v801 = vld [vmem:[#allocation5 + $0x320] sm:$0xff]
        %v802 = vld [vmem:[#allocation5 + $0x328] sm:$0xff]
        %v803 = vld [vmem:[#allocation5 + $0x330] sm:$0xff]
        %v804 = vld [vmem:[#allocation5 + $0x338] sm:$0xff]
        %v805 = vld [vmem:[#allocation5 + $0x340] sm:$0xff]
        %v806 = vld [vmem:[#allocation5 + $0x348] sm:$0xff]
        %v807 = vld [vmem:[#allocation5 + $0x350] sm:$0xff]
        %v808 = vld [vmem:[#allocation5 + $0x358] sm:$0xff]
        %v809 = vld [vmem:[#allocation5 + $0x360] sm:$0xff]
        %v810 = vld [vmem:[#allocation5 + $0x368] sm:$0xff]
        %v811 = vld [vmem:[#allocation5 + $0x370] sm:$0xff]
        %v812 = vld [vmem:[#allocation5 + $0x378] sm:$0xff]
        %v813 = vld [vmem:[#allocation5 + $0x380] sm:$0xff]
        %v814 = vld [vmem:[#allocation5 + $0x388] sm:$0xff]
        %v815 = vld [vmem:[#allocation5 + $0x390] sm:$0xff]
        %v816 = vld [vmem:[#allocation5 + $0x398] sm:$0xff]
        %v817 = vld [vmem:[#allocation5 + $0x3a0] sm:$0xff]
        %v818 = vld [vmem:[#allocation5 + $0x3a8] sm:$0xff]
        %v819 = vld [vmem:[#allocation5 + $0x3b0] sm:$0xff]
        %v820 = vld [vmem:[#allocation5 + $0x3b8] sm:$0xff]
        %v821 = vld [vmem:[#allocation5 + $0x3c0] sm:$0xff]
        %v822 = vld [vmem:[#allocation5 + $0x3c8] sm:$0xff]
        %v823 = vld [vmem:[#allocation5 + $0x3d0] sm:$0xff]
        %v824 = vld [vmem:[#allocation5 + $0x3d8] sm:$0xff]
        %v825 = vld [vmem:[#allocation5 + $0x3e0] sm:$0xff]
        %v826 = vld [vmem:[#allocation5 + $0x3e8] sm:$0xff]
        %v827 = vld [vmem:[#allocation5 + $0x3f0] sm:$0xff]
        %v828 = vld [vmem:[#allocation5 + $0x3f8] sm:$0xff]
        %829 = vmatprep.subr.mxu0 %v762
        %830 = vmatpush1.msra.mxu0 %v761
        %831 = vmatprep.subr.mxu0 %v758
        %832 = vmatpush1.msra.mxu0 %v757
        %833 = vmatprep.subr.mxu0 %v754
        %834 = vmatpush1.msra.mxu0 %v753
        %835 = vmatprep.subr.mxu0 %v750
        %836 = vmatpush1.msra.mxu0 %v749
        %837 = vmatprep.subr.mxu0 %v746
        %838 = vmatpush1.msra.mxu0 %v745
        %839 = vmatprep.subr.mxu0 %v742
        %840 = vmatpush1.msra.mxu0 %v741
        %841 = vmatprep.subr.mxu0 %v738
        %842 = vmatpush1.msra.mxu0 %v737
        %843 = vmatprep.subr.mxu0 %v734
        %844 = vmatpush1.msra.mxu0 %v733
        %845 = vmatprep.subr.mxu0 %v730
        %846 = vmatpush1.msra.mxu0 %v729
        %847 = vmatprep.subr.mxu0 %v726
        %848 = vmatpush1.msra.mxu0 %v725
        %849 = vmatprep.subr.mxu0 %v722
        %850 = vmatpush1.msra.mxu0 %v721
        %851 = vmatprep.subr.mxu0 %v718
        %852 = vmatpush1.msra.mxu0 %v717
        %853 = vmatprep.subr.mxu0 %v714
        %854 = vmatpush1.msra.mxu0 %v713
        %855 = vmatprep.subr.mxu0 %v710
        %856 = vmatpush1.msra.mxu0 %v709
        %857 = vmatprep.subr.mxu0 %v706
        %858 = vmatpush1.msra.mxu0 %v705
        %859 = vmatprep.subr.mxu0 %v702
        %860 = vmatpush1.msra.mxu0 %v701
        %861 = vmatprep.subr.mxu0 %v826
        %862 = vmatpush2.msra.mxu0 %v825
        %863 = vmatprep.subr.mxu0 %v822
        %864 = vmatpush2.msra.mxu0 %v821
        %865 = vmatprep.subr.mxu0 %v818
        %866 = vmatpush2.msra.mxu0 %v817
        %867 = vmatprep.subr.mxu0 %v814
        %868 = vmatpush2.msra.mxu0 %v813
        %869 = vmatprep.subr.mxu0 %v810
        %870 = vmatpush2.msra.mxu0 %v809
        %871 = vmatprep.subr.mxu0 %v806
        %872 = vmatpush2.msra.mxu0 %v805
        %873 = vmatprep.subr.mxu0 %v802
        %874 = vmatpush2.msra.mxu0 %v801
        %875 = vmatprep.subr.mxu0 %v798
        %876 = vmatpush2.msra.mxu0 %v797
        %877 = vmatprep.subr.mxu0 %v794
        %878 = vmatpush2.msra.mxu0 %v793
        %879 = vmatprep.subr.mxu0 %v790
        %880 = vmatpush2.msra.mxu0 %v789
        %881 = vmatprep.subr.mxu0 %v786
        %882 = vmatpush2.msra.mxu0 %v785
        %883 = vmatprep.subr.mxu0 %v782
        %884 = vmatpush2.msra.mxu0 %v781
        %885 = vmatprep.subr.mxu0 %v778
        %886 = vmatpush2.msra.mxu0 %v777
        %887 = vmatprep.subr.mxu0 %v774
        %888 = vmatpush2.msra.mxu0 %v773
        %889 = vmatprep.subr.mxu0 %v770
        %890 = vmatpush2.msra.mxu0 %v769
        %891 = vmatprep.subr.mxu0 %v766
        %892 = vmatpush2.msra.mxu0 %v765
        %893 = vmatprep.mubr.f32.mxu0 %v670
        %894 = vmatmul.mubr.f32.gmra.mxu0 %v669
        %v895 = vpop.f32.mrf.mxu0
        %v896 = vadd.f32 0.0, %v895
        %v897 = vpop.f32.mrf.mxu0
        %v898 = vadd.f32 0.0, %v897
        %899 = vmatprep.mubr.f32.mxu0 %v672
        %900 = vmatmul.mubr.f32.gmra.mxu0 %v671
        %v901 = vpop.f32.mrf.mxu0
        %v902 = vadd.f32 0.0, %v901
        %v903 = vpop.f32.mrf.mxu0
        %v904 = vadd.f32 0.0, %v903
        %905 = vmatprep.mubr.f32.mxu0 %v674
        %906 = vmatmul.mubr.f32.gmra.mxu0 %v673
        %v907 = vpop.f32.mrf.mxu0
        %v908 = vadd.f32 0.0, %v907
        %v909 = vpop.f32.mrf.mxu0
        %v910 = vadd.f32 0.0, %v909
        %911 = vmatprep.mubr.f32.mxu0 %v676
        %912 = vmatmul.mubr.f32.gmra.mxu0 %v675
        %v913 = vpop.f32.mrf.mxu0
        %v914 = vadd.f32 0.0, %v913
        %v915 = vpop.f32.mrf.mxu0
        %v916 = vadd.f32 0.0, %v915
        %917 = vmatprep.mubr.f32.mxu0 %v678
        %918 = vmatmul.mubr.f32.gmra.mxu0 %v677
        %v919 = vpop.f32.mrf.mxu0
        %v920 = vadd.f32 0.0, %v919
        %v921 = vpop.f32.mrf.mxu0
        %v922 = vadd.f32 0.0, %v921
        %923 = vmatprep.mubr.f32.mxu0 %v680
        %924 = vmatmul.mubr.f32.gmra.mxu0 %v679
        %v925 = vpop.f32.mrf.mxu0
        %v926 = vadd.f32 0.0, %v925
        %v927 = vpop.f32.mrf.mxu0
        %v928 = vadd.f32 0.0, %v927
        %929 = vmatprep.mubr.f32.mxu0 %v682
        %930 = vmatmul.mubr.f32.gmra.mxu0 %v681
        %v931 = vpop.f32.mrf.mxu0
        %v932 = vadd.f32 0.0, %v931
        %v933 = vpop.f32.mrf.mxu0
        %v934 = vadd.f32 0.0, %v933
        %935 = vmatprep.mubr.f32.mxu0 %v684
        %936 = vmatmul.mubr.f32.gmra.mxu0 %v683
        %v937 = vpop.f32.mrf.mxu0
        %v938 = vadd.f32 0.0, %v937
        %v939 = vpop.f32.mrf.mxu0
        %v940 = vadd.f32 0.0, %v939
        %941 = vmatprep.mubr.f32.mxu0 %v686
        %942 = vmatmul.mubr.f32.gmra.mxu0 %v685
        %v943 = vpop.f32.mrf.mxu0
        %v944 = vadd.f32 0.0, %v943
        %v945 = vpop.f32.mrf.mxu0
        %v946 = vadd.f32 0.0, %v945
        %947 = vmatprep.mubr.f32.mxu0 %v688
        %948 = vmatmul.mubr.f32.gmra.mxu0 %v687
        %v949 = vpop.f32.mrf.mxu0
        %v950 = vadd.f32 0.0, %v949
        %v951 = vpop.f32.mrf.mxu0
        %v952 = vadd.f32 0.0, %v951
        %953 = vmatprep.mubr.f32.mxu0 %v690
        %954 = vmatmul.mubr.f32.gmra.mxu0 %v689
        %v955 = vpop.f32.mrf.mxu0
        %v956 = vadd.f32 0.0, %v955
        %v957 = vpop.f32.mrf.mxu0
        %v958 = vadd.f32 0.0, %v957
        %959 = vmatprep.mubr.f32.mxu0 %v692
        %960 = vmatmul.mubr.f32.gmra.mxu0 %v691
        %v961 = vpop.f32.mrf.mxu0
        %v962 = vadd.f32 0.0, %v961
        %v963 = vpop.f32.mrf.mxu0
        %v964 = vadd.f32 0.0, %v963
        %965 = vmatprep.mubr.f32.mxu0 %v694
        %966 = vmatmul.mubr.f32.gmra.mxu0 %v693
        %v967 = vpop.f32.mrf.mxu0
        %v968 = vadd.f32 0.0, %v967
        %v969 = vpop.f32.mrf.mxu0
        %v970 = vadd.f32 0.0, %v969
        %971 = vmatprep.mubr.f32.mxu0 %v696
        %972 = vmatmul.mubr.f32.gmra.mxu0 %v695
        %v973 = vpop.f32.mrf.mxu0
        %v974 = vadd.f32 0.0, %v973
        %v975 = vpop.f32.mrf.mxu0
        %v976 = vadd.f32 0.0, %v975
        %977 = vmatprep.mubr.f32.mxu0 %v698
        %978 = vmatmul.mubr.f32.gmra.mxu0 %v697
        %v979 = vpop.f32.mrf.mxu0
        %v980 = vadd.f32 0.0, %v979
        %v981 = vpop.f32.mrf.mxu0
        %v982 = vadd.f32 0.0, %v981
        %983 = vmatprep.mubr.f32.mxu0 %v700
        %984 = vmatmul.mubr.f32.gmra.mxu0 %v699
        %v985 = vpop.f32.mrf.mxu0
        %v986 = vadd.f32 0.0, %v985
        %v987 = vpop.f32.mrf.mxu0
        %v988 = vadd.f32 0.0, %v987
        %989 = vdwg.mxu0
        %990 = vmatprep.subr.mxu0 %v764
        %991 = vmatpush1.msra.mxu0 %v763
        %992 = vmatprep.subr.mxu0 %v760
        %993 = vmatpush1.msra.mxu0 %v759
        %994 = vmatprep.subr.mxu0 %v756
        %995 = vmatpush1.msra.mxu0 %v755
        %996 = vmatprep.subr.mxu0 %v752
        %997 = vmatpush1.msra.mxu0 %v751
        %998 = vmatprep.subr.mxu0 %v748
        %999 = vmatpush1.msra.mxu0 %v747
        %1000 = vmatprep.subr.mxu0 %v744
        %1001 = vmatpush1.msra.mxu0 %v743
        %1002 = vmatprep.subr.mxu0 %v740
        %1003 = vmatpush1.msra.mxu0 %v739
        %1004 = vmatprep.subr.mxu0 %v736
        %1005 = vmatpush1.msra.mxu0 %v735
        %1006 = vmatprep.subr.mxu0 %v732
        %1007 = vmatpush1.msra.mxu0 %v731
        %1008 = vmatprep.subr.mxu0 %v728
        %1009 = vmatpush1.msra.mxu0 %v727
        %1010 = vmatprep.subr.mxu0 %v724
        %1011 = vmatpush1.msra.mxu0 %v723
        %1012 = vmatprep.subr.mxu0 %v720
        %1013 = vmatpush1.msra.mxu0 %v719
        %1014 = vmatprep.subr.mxu0 %v716
        %1015 = vmatpush1.msra.mxu0 %v715
        %1016 = vmatprep.subr.mxu0 %v712
        %1017 = vmatpush1.msra.mxu0 %v711
        %1018 = vmatprep.subr.mxu0 %v708
        %1019 = vmatpush1.msra.mxu0 %v707
        %1020 = vmatprep.subr.mxu0 %v704
        %1021 = vmatpush1.msra.mxu0 %v703
        %1022 = vmatprep.subr.mxu0 %v828
        %1023 = vmatpush2.msra.mxu0 %v827
        %1024 = vmatprep.subr.mxu0 %v824
        %1025 = vmatpush2.msra.mxu0 %v823
        %1026 = vmatprep.subr.mxu0 %v820
        %1027 = vmatpush2.msra.mxu0 %v819
        %1028 = vmatprep.subr.mxu0 %v816
        %1029 = vmatpush2.msra.mxu0 %v815
        %1030 = vmatprep.subr.mxu0 %v812
        %1031 = vmatpush2.msra.mxu0 %v811
        %1032 = vmatprep.subr.mxu0 %v808
        %1033 = vmatpush2.msra.mxu0 %v807
        %1034 = vmatprep.subr.mxu0 %v804
        %1035 = vmatpush2.msra.mxu0 %v803
        %1036 = vmatprep.subr.mxu0 %v800
        %1037 = vmatpush2.msra.mxu0 %v799
        %1038 = vmatprep.subr.mxu0 %v796
        %1039 = vmatpush2.msra.mxu0 %v795
        %1040 = vmatprep.subr.mxu0 %v792
        %1041 = vmatpush2.msra.mxu0 %v791
        %1042 = vmatprep.subr.mxu0 %v788
        %1043 = vmatpush2.msra.mxu0 %v787
        %1044 = vmatprep.subr.mxu0 %v784
        %1045 = vmatpush2.msra.mxu0 %v783
        %1046 = vmatprep.subr.mxu0 %v780
        %1047 = vmatpush2.msra.mxu0 %v779
        %1048 = vmatprep.subr.mxu0 %v776
        %1049 = vmatpush2.msra.mxu0 %v775
        %1050 = vmatprep.subr.mxu0 %v772
        %1051 = vmatpush2.msra.mxu0 %v771
        %1052 = vmatprep.subr.mxu0 %v768
        %1053 = vmatpush2.msra.mxu0 %v767
        %1054 = vmatprep.mubr.f32.mxu0 %v670
        %1055 = vmatmul.mubr.f32.gmra.mxu0 %v669
        %v1056 = vpop.f32.mrf.mxu0
        %v1057 = vadd.f32 0.0, %v1056
        %v1058 = vpop.f32.mrf.mxu0
        %v1059 = vadd.f32 0.0, %v1058
        %1060 = vmatprep.mubr.f32.mxu0 %v672
        %1061 = vmatmul.mubr.f32.gmra.mxu0 %v671
        %v1062 = vpop.f32.mrf.mxu0
        %v1063 = vadd.f32 0.0, %v1062
        %v1064 = vpop.f32.mrf.mxu0
        %v1065 = vadd.f32 0.0, %v1064
        %1066 = vmatprep.mubr.f32.mxu0 %v674
        %1067 = vmatmul.mubr.f32.gmra.mxu0 %v673
        %v1068 = vpop.f32.mrf.mxu0
        %v1069 = vadd.f32 0.0, %v1068
        %v1070 = vpop.f32.mrf.mxu0
        %v1071 = vadd.f32 0.0, %v1070
        %1072 = vmatprep.mubr.f32.mxu0 %v676
        %1073 = vmatmul.mubr.f32.gmra.mxu0 %v675
        %v1074 = vpop.f32.mrf.mxu0
        %v1075 = vadd.f32 0.0, %v1074
        %v1076 = vpop.f32.mrf.mxu0
        %v1077 = vadd.f32 0.0, %v1076
        %1078 = vmatprep.mubr.f32.mxu0 %v678
        %1079 = vmatmul.mubr.f32.gmra.mxu0 %v677
        %v1080 = vpop.f32.mrf.mxu0
        %v1081 = vadd.f32 0.0, %v1080
        %v1082 = vpop.f32.mrf.mxu0
        %v1083 = vadd.f32 0.0, %v1082
        %1084 = vmatprep.mubr.f32.mxu0 %v680
        %1085 = vmatmul.mubr.f32.gmra.mxu0 %v679
        %v1086 = vpop.f32.mrf.mxu0
        %v1087 = vadd.f32 0.0, %v1086
        %v1088 = vpop.f32.mrf.mxu0
        %v1089 = vadd.f32 0.0, %v1088
        %1090 = vmatprep.mubr.f32.mxu0 %v682
        %1091 = vmatmul.mubr.f32.gmra.mxu0 %v681
        %v1092 = vpop.f32.mrf.mxu0
        %v1093 = vadd.f32 0.0, %v1092
        %v1094 = vpop.f32.mrf.mxu0
        %v1095 = vadd.f32 0.0, %v1094
        %1096 = vmatprep.mubr.f32.mxu0 %v684
        %1097 = vmatmul.mubr.f32.gmra.mxu0 %v683
        %v1098 = vpop.f32.mrf.mxu0
        %v1099 = vadd.f32 0.0, %v1098
        %v1100 = vpop.f32.mrf.mxu0
        %v1101 = vadd.f32 0.0, %v1100
        %1102 = vmatprep.mubr.f32.mxu0 %v686
        %1103 = vmatmul.mubr.f32.gmra.mxu0 %v685
        %v1104 = vpop.f32.mrf.mxu0
        %v1105 = vadd.f32 0.0, %v1104
        %v1106 = vpop.f32.mrf.mxu0
        %v1107 = vadd.f32 0.0, %v1106
        %1108 = vmatprep.mubr.f32.mxu0 %v688
        %1109 = vmatmul.mubr.f32.gmra.mxu0 %v687
        %v1110 = vpop.f32.mrf.mxu0
        %v1111 = vadd.f32 0.0, %v1110
        %v1112 = vpop.f32.mrf.mxu0
        %v1113 = vadd.f32 0.0, %v1112
        %1114 = vmatprep.mubr.f32.mxu0 %v690
        %1115 = vmatmul.mubr.f32.gmra.mxu0 %v689
        %v1116 = vpop.f32.mrf.mxu0
        %v1117 = vadd.f32 0.0, %v1116
        %v1118 = vpop.f32.mrf.mxu0
        %v1119 = vadd.f32 0.0, %v1118
        %1120 = vmatprep.mubr.f32.mxu0 %v692
        %1121 = vmatmul.mubr.f32.gmra.mxu0 %v691
        %v1122 = vpop.f32.mrf.mxu0
        %v1123 = vadd.f32 0.0, %v1122
        %v1124 = vpop.f32.mrf.mxu0
        %v1125 = vadd.f32 0.0, %v1124
        %1126 = vmatprep.mubr.f32.mxu0 %v694
        %1127 = vmatmul.mubr.f32.gmra.mxu0 %v693
        %v1128 = vpop.f32.mrf.mxu0
        %v1129 = vadd.f32 0.0, %v1128
        %v1130 = vpop.f32.mrf.mxu0
        %v1131 = vadd.f32 0.0, %v1130
        %1132 = vmatprep.mubr.f32.mxu0 %v696
        %1133 = vmatmul.mubr.f32.gmra.mxu0 %v695
        %v1134 = vpop.f32.mrf.mxu0
        %v1135 = vadd.f32 0.0, %v1134
        %v1136 = vpop.f32.mrf.mxu0
        %v1137 = vadd.f32 0.0, %v1136
        %1138 = vmatprep.mubr.f32.mxu0 %v698
        %1139 = vmatmul.mubr.f32.gmra.mxu0 %v697
        %v1140 = vpop.f32.mrf.mxu0
        %v1141 = vadd.f32 0.0, %v1140
        %v1142 = vpop.f32.mrf.mxu0
        %v1143 = vadd.f32 0.0, %v1142
        %1144 = vmatprep.mubr.f32.mxu0 %v700
        %1145 = vmatmul.mubr.f32.gmra.mxu0 %v699
        %v1146 = vpop.f32.mrf.mxu0
        %v1147 = vadd.f32 0.0, %v1146
        %v1148 = vpop.f32.mrf.mxu0
        %v1149 = vadd.f32 0.0, %v1148
        %1150 = vdwg.mxu0
        %1151 = vst [vmem:[%s238] sm:$0xff] %v896
        %1152 = vst [vmem:[%s238 + $0x8] sm:$0xff] %v898
        %1153 = vst [vmem:[%s238 + $0x10] sm:$0xff] %v1057
        %1154 = vst [vmem:[%s238 + $0x18] sm:$0xff] %v1059
        %1155 = vst [vmem:[%s238 + $0x20] sm:$0xff] %v902
        %1156 = vst [vmem:[%s238 + $0x28] sm:$0xff] %v904
        %1157 = vst [vmem:[%s238 + $0x30] sm:$0xff] %v1063
        %1158 = vst [vmem:[%s238 + $0x38] sm:$0xff] %v1065
        %1159 = vst [vmem:[%s238 + $0x40] sm:$0xff] %v908
        %1160 = vst [vmem:[%s238 + $0x48] sm:$0xff] %v910
        %1161 = vst [vmem:[%s238 + $0x50] sm:$0xff] %v1069
        %1162 = vst [vmem:[%s238 + $0x58] sm:$0xff] %v1071
        %1163 = vst [vmem:[%s238 + $0x60] sm:$0xff] %v914
        %1164 = vst [vmem:[%s238 + $0x68] sm:$0xff] %v916
        %1165 = vst [vmem:[%s238 + $0x70] sm:$0xff] %v1075
        %1166 = vst [vmem:[%s238 + $0x78] sm:$0xff] %v1077
        %1167 = vst [vmem:[%s238 + $0x80] sm:$0xff] %v920
        %1168 = vst [vmem:[%s238 + $0x88] sm:$0xff] %v922
        %1169 = vst [vmem:[%s238 + $0x90] sm:$0xff] %v1081
        %1170 = vst [vmem:[%s238 + $0x98] sm:$0xff] %v1083
        %1171 = vst [vmem:[%s238 + $0xa0] sm:$0xff] %v926
        %1172 = vst [vmem:[%s238 + $0xa8] sm:$0xff] %v928
        %1173 = vst [vmem:[%s238 + $0xb0] sm:$0xff] %v1087
        %1174 = vst [vmem:[%s238 + $0xb8] sm:$0xff] %v1089
        %1175 = vst [vmem:[%s238 + $0xc0] sm:$0xff] %v932
        %1176 = vst [vmem:[%s238 + $0xc8] sm:$0xff] %v934
        %1177 = vst [vmem:[%s238 + $0xd0] sm:$0xff] %v1093
        %1178 = vst [vmem:[%s238 + $0xd8] sm:$0xff] %v1095
        %1179 = vst [vmem:[%s238 + $0xe0] sm:$0xff] %v938
        %1180 = vst [vmem:[%s238 + $0xe8] sm:$0xff] %v940
        %1181 = vst [vmem:[%s238 + $0xf0] sm:$0xff] %v1099
        %1182 = vst [vmem:[%s238 + $0xf8] sm:$0xff] %v1101
        %1183 = vst [vmem:[%s238 + $0x100] sm:$0xff] %v944
        %1184 = vst [vmem:[%s238 + $0x108] sm:$0xff] %v946
        %1185 = vst [vmem:[%s238 + $0x110] sm:$0xff] %v1105
        %1186 = vst [vmem:[%s238 + $0x118] sm:$0xff] %v1107
        %1187 = vst [vmem:[%s238 + $0x120] sm:$0xff] %v950
        %1188 = vst [vmem:[%s238 + $0x128] sm:$0xff] %v952
        %1189 = vst [vmem:[%s238 + $0x130] sm:$0xff] %v1111
        %1190 = vst [vmem:[%s238 + $0x138] sm:$0xff] %v1113
        %1191 = vst [vmem:[%s238 + $0x140] sm:$0xff] %v956
        %1192 = vst [vmem:[%s238 + $0x148] sm:$0xff] %v958
        %1193 = vst [vmem:[%s238 + $0x150] sm:$0xff] %v1117
        %1194 = vst [vmem:[%s238 + $0x158] sm:$0xff] %v1119
        %1195 = vst [vmem:[%s238 + $0x160] sm:$0xff] %v962
        %1196 = vst [vmem:[%s238 + $0x168] sm:$0xff] %v964
        %1197 = vst [vmem:[%s238 + $0x170] sm:$0xff] %v1123
        %1198 = vst [vmem:[%s238 + $0x178] sm:$0xff] %v1125
        %1199 = vst [vmem:[%s238 + $0x180] sm:$0xff] %v968
        %1200 = vst [vmem:[%s238 + $0x188] sm:$0xff] %v970
        %1201 = vst [vmem:[%s238 + $0x190] sm:$0xff] %v1129
        %1202 = vst [vmem:[%s238 + $0x198] sm:$0xff] %v1131
        %1203 = vst [vmem:[%s238 + $0x1a0] sm:$0xff] %v974
        %1204 = vst [vmem:[%s238 + $0x1a8] sm:$0xff] %v976
        %1205 = vst [vmem:[%s238 + $0x1b0] sm:$0xff] %v1135
        %1206 = vst [vmem:[%s238 + $0x1b8] sm:$0xff] %v1137
        %1207 = vst [vmem:[%s238 + $0x1c0] sm:$0xff] %v980
        %1208 = vst [vmem:[%s238 + $0x1c8] sm:$0xff] %v982
        %1209 = vst [vmem:[%s238 + $0x1d0] sm:$0xff] %v1141
        %1210 = vst [vmem:[%s238 + $0x1d8] sm:$0xff] %v1143
        %1211 = vst [vmem:[%s238 + $0x1e0] sm:$0xff] %v986
        %1212 = vst [vmem:[%s238 + $0x1e8] sm:$0xff] %v988
        %1213 = vst [vmem:[%s238 + $0x1f0] sm:$0xff] %v1147
        %1214 = vst [vmem:[%s238 + $0x1f8] sm:$0xff] %v1149
        %s1215 = smul.u32 4, %s20
        %s1216 = smul.u32 4, %s21
        %p1217 = scmp.lt.s32.totalorder %s1215, 7
        %s1218 = scalar_select %p1217, %s1215, 7
        %p1219 = scmp.lt.s32.totalorder %s1216, 3
        %s1220 = scalar_select %p1219, %s1216, 3
        %s1221 = smul.addr %s1218, 16
        %s1222 = sadd.s32 %s1220, %s1221
        %s1223 = smul.addr %s1222, 8
        %s1224 = scalar_lea.vmem %s3, %s1223
        // Predicated region
        $region45: #{_unnamed_function_.1} parent=31 // pred_check
          %p1225 = pneg %p121
        $region46: #{_unnamed_function_.1} parent=31 // pred_check_branch
          %1227 = sbr.rel (%p1225) target = $region48
        $region47: #{_unnamed_function_.1} parent=31 // pred_region
          %s1228 = smul.u32 4, %s20
          %s1229 = smul.u32 4, %s21
        $region48: #{_unnamed_function_.1} parent=31 // pred_fallthru
          _
      $region32: #{_unnamed_function_.1} parent=5 // pred_fallthru
        _
      %p1230 = scmp.le.s32.totalorder 2, %s11
      // Predicated region
      $region49: #{_unnamed_function_.1} parent=5 // pred_check
        %p1231 = pneg %p1230
      $region50: #{_unnamed_function_.1} parent=5 // pred_check_branch
        %1233 = sbr.rel (%p1231) target = $region52
      $region51: #{_unnamed_function_.1} parent=5 // pred_region
        %s1234 = ssub.s32 %s11, 2
        // Predicated region
        $region53: #{_unnamed_function_.1} parent=51 // pred_check
          %p1235 = pneg %p127
        $region54: #{_unnamed_function_.1} parent=51 // pred_check_branch
          %1237 = sbr.rel (%p1235) target = $region56
        $region55: #{_unnamed_function_.1} parent=51 // pred_region
          %s1238 = smul.u32 4, %s22
          %s1239 = smul.u32 4, %s23
          %p1240 = scmp.lt.s32.totalorder %s1238, 7
          %s1241 = scalar_select %p1240, %s1238, 7
          %p1242 = scmp.lt.s32.totalorder %s1239, 3
          %s1243 = scalar_select %p1242, %s1239, 3
          %s1244 = smul.addr %s1241, 16
          %s1245 = sadd.s32 %s1243, %s1244
          %s1246 = smul.addr %s1245, 8
          %s1247 = scalar_lea.vmem %s3, %s1246
        $region56: #{_unnamed_function_.1} parent=51 // pred_fallthru
          _
      $region52: #{_unnamed_function_.1} parent=5 // pred_fallthru
        _
    $region6: #{_unnamed_function_.1} parent=1 // loop_footer
      %s15 = sadd.s32 1, %s11
    $region7: #{_unnamed_function_.1} parent=1 // loop_footer_branch
      %10 = sbr.rel target = $region3
    $region8: #{_unnamed_function_.1} parent=1 // loop_exit
      _
    %1248 = vsyncpa [#allocation4], 1
    %s1249 = scalar_lea.sflag [#allocation4], 1
    %1250 = vsyncpa %s1249, 1
    %1251 = vsyncpa [#allocation6], 1

</llo_original>
